<compile_context>
chip_gen: v7x
topology: tpu7x:2x2x1
jax: 0.10.0
libtpu: 0.0.40
codegen_flags: <defaults>
</compile_context>

<pallas_src>
import math

import jax
import jax.numpy as jnp
from jax.experimental import pallas as pl
from jax.experimental.pallas import tpu as pltpu

# lowbias32 hash constants, written as signed int32 literals.
_GOLD = -1640531527   # 0x9E3779B9
_C1 = 2146121005      # 0x7FEB352D
_C2 = -2073549173     # 0x846CA68B


def _random_mask_kernel(seed_ref, thresh_ref, out_ref):
    tm, lanes = out_ref.shape
    # Global element counter for this tile (row-major over the padded slab):
    # unique per element and independent of tiling / grid sharding.
    row = jax.lax.broadcasted_iota(jnp.int32, (tm, lanes), 0)
    col = jax.lax.broadcasted_iota(jnp.int32, (tm, lanes), 1)
    idx = (pl.program_id(0) * tm + row) * lanes + col

    # Counter-based hash (lowbias32) in wrapping int32 arithmetic; masked
    # arithmetic shifts emulate logical shifts so everything stays int32.
    x = idx + seed_ref[0] * _GOLD
    x = x ^ ((x >> 16) & 0xFFFF)
    x = x * _C1
    x = x ^ ((x >> 15) & 0x1FFFF)
    x = x * _C2
    x = x ^ ((x >> 16) & 0xFFFF)

    # Top 24 hash bits -> uniform integer in [0, 2^24); keep iff below threshold.
    u24 = (x >> 8) & 0x00FFFFFF
    out_ref[...] = (u24 < thresh_ref[0]).astype(jnp.float32)


def random_mask_generator(x, dropout_rate, seed=0):
    """Pallas equivalent of RandomMaskGenerator.forward(x)."""
    shape = tuple(x.shape)
    n_total = math.prod(shape)

    keep = 1.0 - float(dropout_rate)
    # 24-bit integer threshold: exact at keep == 0.0 (all zeros) and keep == 1.0
    # (2^24 exceeds every 24-bit draw -> all ones); fits int32, no overflow to clamp.
    thresh24 = max(0, min(int(round(keep * (1 << 24))), 1 << 24))

    # Fold the seed into int32 range.
    seed = int(seed) & 0xFFFFFFFF
    if seed >= 1 << 31:
        seed -= 1 << 32

    # Lane-dense slab: flatten to (rows, LANES) with LANES a large multiple of 128
    # (unmasked vst), then tile rows so the writeback pipelines with compute.
    LANES = 1024
    n_rows = pl.cdiv(n_total, LANES)
    tm = min(512, n_rows)                   # <= 512*1024*4B = 2 MiB output block
    grid_rows = pl.cdiv(n_rows, tm)
    n_rows_padded = grid_rows * tm
    padded_total = n_rows_padded * LANES

    seed_arr = jnp.array([seed], dtype=jnp.int32)
    thresh_arr = jnp.array([thresh24], dtype=jnp.int32)

    flat = pl.pallas_call(
        _random_mask_kernel,
        out_shape=jax.ShapeDtypeStruct((n_rows_padded, LANES), jnp.float32),
        grid=(grid_rows,),
        in_specs=[
            pl.BlockSpec(memory_space=pltpu.MemorySpace.SMEM),  # seed scalar
            pl.BlockSpec(memory_space=pltpu.MemorySpace.SMEM),  # keep-prob threshold
        ],
        out_specs=pl.BlockSpec((tm, LANES), lambda i: (i, 0)),
        compiler_params=pltpu.CompilerParams(
            dimension_semantics=("parallel",),      # v7x: shard rows across both TCs
            vmem_limit_bytes=32 * 1024 * 1024,      # headroom over v5e's 16 MiB default
        ),
        cost_estimate=pl.CostEstimate(
            flops=8 * padded_total,
            transcendentals=0,
            bytes_accessed=4 * padded_total,        # pure-writeback kernel
        ),
    )(seed_arr, thresh_arr)

    return flat.reshape(-1)[:n_total].reshape(shape)


if __name__ == "__main__":
    key = jax.random.PRNGKey(0)
    # Small MLP-style input: batch=8, hidden=128 (only x.shape is used by the module).
    x = jax.random.normal(key, (8, 128), dtype=jnp.float32)

    dropout_rate = 0.5
    mask = random_mask_generator(x, dropout_rate, seed=1234)
    mask = jax.block_until_ready(mask)

    # Shape / dtype / value-set checks (matches torch.bernoulli output semantics).
    assert mask.shape == x.shape
    assert mask.dtype == jnp.float32
    assert bool(jnp.all((mask == 0.0) | (mask == 1.0)))

    # Keep-rate is roughly 1 - dropout_rate (very loose bound, 1024 samples).
    m = float(jnp.mean(mask))
    assert 0.3 < m < 0.7, m

    # Exact edge cases: dropout 0 -> all ones, dropout 1 -> all zeros.
    ones = jax.block_until_ready(random_mask_generator(x, 0.0, seed=7))
    zeros = jax.block_until_ready(random_mask_generator(x, 1.0, seed=7))
    assert bool(jnp.all(ones == 1.0))
    assert bool(jnp.all(zeros == 0.0))

    print("KERNEL_OK")
</pallas_src>

<mosaic_0001>
module attributes {stable_mosaic.version = 11 : i64} {
  func.func @_random_mask_kernel(%arg0: i32, %arg1: memref<1xi32, #tpu.memory_space<smem>>, %arg2: memref<1xi32, #tpu.memory_space<smem>>, %arg3: memref<1x1024xf32, #tpu.memory_space<vmem>>) attributes {dimension_semantics = [#tpu.dimension_semantics<parallel>], iteration_bounds = array<i64: 1>, scalar_prefetch = 0 : i64, scratch_operands = 0 : i64, tpu.core_type = #tpu.core_type<tc>, window_params = [{transform_indices = @transform_0, window_bounds = array<i64: 1>}, {transform_indices = @transform_1, window_bounds = array<i64: 1>}, {transform_indices = @transform_2, window_bounds = array<i64: 1, 1024>}]} {
    %0 = tpu.iota {dimensions = array<i32: 0>} : vector<1x1024xi32>
    %1 = tpu.iota {dimensions = array<i32: 1>} : vector<1x1024xi32>
    %c1_i32 = arith.constant 1 : i32
    %2 = arith.muli %arg0, %c1_i32 : i32
    %3 = vector.broadcast %2 : i32 to vector<1x1024xi32>
    %4 = arith.addi %3, %0 : vector<1x1024xi32>
    %c1024_i32 = arith.constant 1024 : i32
    %5 = vector.broadcast %c1024_i32 : i32 to vector<1x1024xi32>
    %6 = arith.muli %4, %5 : vector<1x1024xi32>
    %7 = arith.addi %6, %1 : vector<1x1024xi32>
    %c0 = arith.constant 0 : index
    %8 = memref.load %arg1[%c0] : memref<1xi32, #tpu.memory_space<smem>>
    %c-1640531527_i32 = arith.constant -1640531527 : i32
    %9 = arith.muli %8, %c-1640531527_i32 : i32
    %10 = vector.broadcast %9 : i32 to vector<1x1024xi32>
    %11 = arith.addi %7, %10 : vector<1x1024xi32>
    %c16_i32 = arith.constant 16 : i32
    %12 = vector.broadcast %c16_i32 : i32 to vector<1x1024xi32>
    %13 = arith.shrsi %11, %12 : vector<1x1024xi32>
    %c65535_i32 = arith.constant 65535 : i32
    %14 = vector.broadcast %c65535_i32 : i32 to vector<1x1024xi32>
    %15 = arith.andi %13, %14 : vector<1x1024xi32>
    %16 = arith.xori %11, %15 : vector<1x1024xi32>
    %c2146121005_i32 = arith.constant 2146121005 : i32
    %17 = vector.broadcast %c2146121005_i32 : i32 to vector<1x1024xi32>
    %18 = arith.muli %16, %17 : vector<1x1024xi32>
    %c15_i32 = arith.constant 15 : i32
    %19 = vector.broadcast %c15_i32 : i32 to vector<1x1024xi32>
    %20 = arith.shrsi %18, %19 : vector<1x1024xi32>
    %c131071_i32 = arith.constant 131071 : i32
    %21 = vector.broadcast %c131071_i32 : i32 to vector<1x1024xi32>
    %22 = arith.andi %20, %21 : vector<1x1024xi32>
    %23 = arith.xori %18, %22 : vector<1x1024xi32>
    %c-2073549173_i32 = arith.constant -2073549173 : i32
    %24 = vector.broadcast %c-2073549173_i32 : i32 to vector<1x1024xi32>
    %25 = arith.muli %23, %24 : vector<1x1024xi32>
    %c16_i32_0 = arith.constant 16 : i32
    %26 = vector.broadcast %c16_i32_0 : i32 to vector<1x1024xi32>
    %27 = arith.shrsi %25, %26 : vector<1x1024xi32>
    %c65535_i32_1 = arith.constant 65535 : i32
    %28 = vector.broadcast %c65535_i32_1 : i32 to vector<1x1024xi32>
    %29 = arith.andi %27, %28 : vector<1x1024xi32>
    %30 = arith.xori %25, %29 : vector<1x1024xi32>
    %c8_i32 = arith.constant 8 : i32
    %31 = vector.broadcast %c8_i32 : i32 to vector<1x1024xi32>
    %32 = arith.shrsi %30, %31 : vector<1x1024xi32>
    %c16777215_i32 = arith.constant 16777215 : i32
    %33 = vector.broadcast %c16777215_i32 : i32 to vector<1x1024xi32>
    %34 = arith.andi %32, %33 : vector<1x1024xi32>
    %c0_2 = arith.constant 0 : index
    %35 = memref.load %arg2[%c0_2] : memref<1xi32, #tpu.memory_space<smem>>
    %36 = vector.broadcast %35 : i32 to vector<1x1024xi32>
    %37 = arith.cmpi slt, %34, %36 : vector<1x1024xi32>
    %38 = arith.extui %37 : vector<1x1024xi1> to vector<1x1024xi32>
    %39 = arith.sitofp %38 : vector<1x1024xi32> to vector<1x1024xf32>
    %c0_3 = arith.constant 0 : index
    %c0_4 = arith.constant 0 : index
    %40 = vector.load %arg3[%c0_3, %c0_4] : memref<1x1024xf32, #tpu.memory_space<vmem>>, vector<1x1024xf32>
    tpu.vector_store %arg3[%c0_3, %c0_4], %39 {strides = array<i32>} : memref<1x1024xf32, #tpu.memory_space<vmem>>, vector<1x1024xf32>,
    return
  }
  func.func @transform_0(%arg0: i32) -> i32 {
    %c0_i32 = arith.constant 0 : i32
    %c0_i32_0 = arith.constant 0 : i32
    return %c0_i32 : i32
  }
  func.func @transform_1(%arg0: i32) -> i32 {
    %c0_i32 = arith.constant 0 : i32
    %c0_i32_0 = arith.constant 0 : i32
    return %c0_i32 : i32
  }
  func.func @transform_2(%arg0: i32) -> (i32, i32) {
    %c0_i32 = arith.constant 0 : i32
    %c0_i32_0 = arith.constant 0 : i32
    return %arg0, %c0_i32 : i32, i32
  }
}

</mosaic_0001>

<llo_original>
// kernel: tpu_custom_call.1
$region0: #{tpu_custom_call.1}
  #allocation0 [shape = 'u32[]', space=smem, size = 0x4, offset = 0x4, fixed_abs, tag = 'smem constant byte address 0x4 - core index']
  #allocation1 [shape = 'u32[144,128]{1,0:T(1,128)}', space=vmem, size = 0x12000, scoped, tag = 'internal scratch']
  #allocation2 [shape = 's32[1]{0:T(128)S(6)}', space=smem, size = 0x200, scoped, tag = 'scoped memory for tpu_custom_call.1']
  #allocation3 [shape = 's32[1]{0:T(128)S(6)}', space=smem, size = 0x200, scoped, tag = 'scoped memory for tpu_custom_call.1']
  %s0 = inlined_call_operand.<no memory space> [shape: s32[1], index: 0, kind: input, shape index: {}]
  %s1 = inlined_call_operand.<no memory space> [shape: s32[1], index: 1, kind: input, shape index: {}]
  %s2 = inlined_call_operand.hbm [shape: f32[1,1024], index: 2, kind: output, shape index: {}]
  %s3 = sld [smem:[#allocation0]]
  $region18: #{tpu_custom_call.1} parent=0
    _
  %s5 = ssub.s32 1, %s3
  %s6 = scalar_select 0, %s5, %s3
  %7 = sst [smem:[#allocation2]] %s0
  %8 = sst [smem:[#allocation3]] %s1
  $region1: #{tpu_custom_call.1} parent=0
    #allocation4 [shape = 'u8[4096]{0}', space=vmem, size = 0x1000, scoped, tag = 'output window, operand 0, single buffered']
    #allocation5 [shape = 's32[1]{0}', space=sflag, size = 0x4, scoped, tag = 'scoped memory for tpu_custom_call.1']
    %9 = vsyncpa [#allocation5], 0
    // Predicated region
    $region2: #{tpu_custom_call.1} parent=1 // pred_check
      _
    $region3: #{tpu_custom_call.1} parent=1 // pred_check_branch
      %11 = sbr.rel (0) target = $region5
    $region4: #{tpu_custom_call.1} parent=1 // pred_region
      _
    $region5: #{tpu_custom_call.1} parent=1 // pred_fallthru
      _
    // Predicated region
    $region6: #{tpu_custom_call.1} parent=1 // pred_check
      _
    $region7: #{tpu_custom_call.1} parent=1 // pred_check_branch
      %13 = sbr.rel (0) target = $region9
    $region8: #{tpu_custom_call.1} parent=1 // pred_region
      _
    $region9: #{tpu_custom_call.1} parent=1 // pred_fallthru
      _
    %v14 = vlaneseq
    %v15 = vshrl.u32 %v14, 7
    %v16 = vlaneseq
    %v17 = vand.u32 %v16, 127
    %v18 = vadd.s32 %v17, 128
    %v19 = vadd.s32 %v17, 256
    %v20 = vadd.s32 %v17, 384
    %v21 = vadd.s32 %v17, 512
    %v22 = vadd.s32 %v17, 640
    %v23 = vadd.s32 %v17, 768
    %v24 = vadd.s32 %v17, 896
    %v25 = vstv 0
    %v26 = vadd.s32 %v25, %v15
    %v27 = vmul.u32 %v26, 1024
    %v28 = vadd.s32 %v27, %v17
    %v29 = vadd.s32 %v27, %v18
    %v30 = vadd.s32 %v27, %v19
    %v31 = vadd.s32 %v27, %v20
    %v32 = vadd.s32 %v27, %v21
    %v33 = vadd.s32 %v27, %v22
    %v34 = vadd.s32 %v27, %v23
    %v35 = vadd.s32 %v27, %v24
    %s36 = sld [smem:[#allocation2]]
    %s37 = smul.u32 %s36, 2654435769
    %v38 = vstv %s37
    %v39 = vadd.s32 %v28, %v38
    %v40 = vadd.s32 %v29, %v38
    %v41 = vadd.s32 %v30, %v38
    %v42 = vadd.s32 %v31, %v38
    %v43 = vadd.s32 %v32, %v38
    %v44 = vadd.s32 %v33, %v38
    %v45 = vadd.s32 %v34, %v38
    %v46 = vadd.s32 %v35, %v38
    %v47 = vshra.s32 %v39, 16
    %v48 = vshra.s32 %v40, 16
    %v49 = vshra.s32 %v41, 16
    %v50 = vshra.s32 %v42, 16
    %v51 = vshra.s32 %v43, 16
    %v52 = vshra.s32 %v44, 16
    %v53 = vshra.s32 %v45, 16
    %v54 = vshra.s32 %v46, 16
    %v55 = vand.u32 %v47, 65535
    %v56 = vand.u32 %v48, 65535
    %v57 = vand.u32 %v49, 65535
    %v58 = vand.u32 %v50, 65535
    %v59 = vand.u32 %v51, 65535
    %v60 = vand.u32 %v52, 65535
    %v61 = vand.u32 %v53, 65535
    %v62 = vand.u32 %v54, 65535
    %v63 = vxor.u32 %v39, %v55
    %v64 = vxor.u32 %v40, %v56
    %v65 = vxor.u32 %v41, %v57
    %v66 = vxor.u32 %v42, %v58
    %v67 = vxor.u32 %v43, %v59
    %v68 = vxor.u32 %v44, %v60
    %v69 = vxor.u32 %v45, %v61
    %v70 = vxor.u32 %v46, %v62
    %v71 = vmul.u32 %v63, 2146121005
    %v72 = vmul.u32 %v64, 2146121005
    %v73 = vmul.u32 %v65, 2146121005
    %v74 = vmul.u32 %v66, 2146121005
    %v75 = vmul.u32 %v67, 2146121005
    %v76 = vmul.u32 %v68, 2146121005
    %v77 = vmul.u32 %v69, 2146121005
    %v78 = vmul.u32 %v70, 2146121005
    %v79 = vshra.s32 %v71, 15
    %v80 = vshra.s32 %v72, 15
    %v81 = vshra.s32 %v73, 15
    %v82 = vshra.s32 %v74, 15
    %v83 = vshra.s32 %v75, 15
    %v84 = vshra.s32 %v76, 15
    %v85 = vshra.s32 %v77, 15
    %v86 = vshra.s32 %v78, 15
    %v87 = vand.u32 %v79, 131071
    %v88 = vand.u32 %v80, 131071
    %v89 = vand.u32 %v81, 131071
    %v90 = vand.u32 %v82, 131071
    %v91 = vand.u32 %v83, 131071
    %v92 = vand.u32 %v84, 131071
    %v93 = vand.u32 %v85, 131071
    %v94 = vand.u32 %v86, 131071
    %v95 = vxor.u32 %v71, %v87
    %v96 = vxor.u32 %v72, %v88
    %v97 = vxor.u32 %v73, %v89
    %v98 = vxor.u32 %v74, %v90
    %v99 = vxor.u32 %v75, %v91
    %v100 = vxor.u32 %v76, %v92
    %v101 = vxor.u32 %v77, %v93
    %v102 = vxor.u32 %v78, %v94
    %v103 = vmul.u32 %v95, 2221418123
    %v104 = vmul.u32 %v96, 2221418123
    %v105 = vmul.u32 %v97, 2221418123
    %v106 = vmul.u32 %v98, 2221418123
    %v107 = vmul.u32 %v99, 2221418123
    %v108 = vmul.u32 %v100, 2221418123
    %v109 = vmul.u32 %v101, 2221418123
    %v110 = vmul.u32 %v102, 2221418123
    %v111 = vshra.s32 %v103, 16
    %v112 = vshra.s32 %v104, 16
    %v113 = vshra.s32 %v105, 16
    %v114 = vshra.s32 %v106, 16
    %v115 = vshra.s32 %v107, 16
    %v116 = vshra.s32 %v108, 16
    %v117 = vshra.s32 %v109, 16
    %v118 = vshra.s32 %v110, 16
    %v119 = vand.u32 %v111, 65535
    %v120 = vand.u32 %v112, 65535
    %v121 = vand.u32 %v113, 65535
    %v122 = vand.u32 %v114, 65535
    %v123 = vand.u32 %v115, 65535
    %v124 = vand.u32 %v116, 65535
    %v125 = vand.u32 %v117, 65535
    %v126 = vand.u32 %v118, 65535
    %v127 = vxor.u32 %v103, %v119
    %v128 = vxor.u32 %v104, %v120
    %v129 = vxor.u32 %v105, %v121
    %v130 = vxor.u32 %v106, %v122
    %v131 = vxor.u32 %v107, %v123
    %v132 = vxor.u32 %v108, %v124
    %v133 = vxor.u32 %v109, %v125
    %v134 = vxor.u32 %v110, %v126
    %v135 = vshra.s32 %v127, 8
    %v136 = vshra.s32 %v128, 8
    %v137 = vshra.s32 %v129, 8
    %v138 = vshra.s32 %v130, 8
    %v139 = vshra.s32 %v131, 8
    %v140 = vshra.s32 %v132, 8
    %v141 = vshra.s32 %v133, 8
    %v142 = vshra.s32 %v134, 8
    %v143 = vand.u32 %v135, 16777215
    %v144 = vand.u32 %v136, 16777215
    %v145 = vand.u32 %v137, 16777215
    %v146 = vand.u32 %v138, 16777215
    %v147 = vand.u32 %v139, 16777215
    %v148 = vand.u32 %v140, 16777215
    %v149 = vand.u32 %v141, 16777215
    %v150 = vand.u32 %v142, 16777215
    %s151 = sld [smem:[#allocation3]]
    %v152 = vstv %s151
    %vm153 = vcmp.lt.s32.totalorder %v143, %v152
    %vm154 = vcmp.lt.s32.totalorder %v144, %v152
    %vm155 = vcmp.lt.s32.totalorder %v145, %v152
    %vm156 = vcmp.lt.s32.totalorder %v146, %v152
    %vm157 = vcmp.lt.s32.totalorder %v147, %v152
    %vm158 = vcmp.lt.s32.totalorder %v148, %v152
    %vm159 = vcmp.lt.s32.totalorder %v149, %v152
    %vm160 = vcmp.lt.s32.totalorder %v150, %v152
    %v161 = vsel %vm153, 1, 0
    %v162 = vsel %vm154, 1, 0
    %v163 = vsel %vm155, 1, 0
    %v164 = vsel %vm156, 1, 0
    %v165 = vsel %vm157, 1, 0
    %v166 = vsel %vm158, 1, 0
    %v167 = vsel %vm159, 1, 0
    %v168 = vsel %vm160, 1, 0
    %v169 = vcvt.s32.f32 %v161
    %v170 = vcvt.s32.f32 %v162
    %v171 = vcvt.s32.f32 %v163
    %v172 = vcvt.s32.f32 %v164
    %v173 = vcvt.s32.f32 %v165
    %v174 = vcvt.s32.f32 %v166
    %v175 = vcvt.s32.f32 %v167
    %v176 = vcvt.s32.f32 %v168
    %v185 = vcombine.low %v169, %v170
    %v186 = vcombine.low %v171, %v172
    %v187 = vcombine.low %v173, %v174
    %v188 = vcombine.low %v175, %v176
    %v190 = vunpack.c.l.s4 1966171168
    %v191 = vunpack.c.0.s8 %v190
    %v192 = vlaneseq
    %v193 = vshrl.u32 %v192, 7
    %v194 = vsub.s32 %v191, %v193
    %v195 = vrot.slane %v185, %v194
    %v197 = vunpack.c.l.s4 1966171168
    %v198 = vunpack.c.0.s8 %v197
    %v199 = vlaneseq
    %v200 = vshrl.u32 %v199, 7
    %v201 = vsub.s32 %v198, %v200
    %v202 = vrot.slane %v186, %v201
    %v204 = vunpack.c.l.s4 1966171168
    %v205 = vunpack.c.0.s8 %v204
    %v206 = vlaneseq
    %v207 = vshrl.u32 %v206, 7
    %v208 = vsub.s32 %v205, %v207
    %v209 = vrot.slane %v187, %v208
    %v211 = vunpack.c.l.s4 1966171168
    %v212 = vunpack.c.0.s8 %v211
    %v213 = vlaneseq
    %v214 = vshrl.u32 %v213, 7
    %v215 = vsub.s32 %v212, %v214
    %v216 = vrot.slane %v188, %v215
    %v217 = vcombine.low %v195, %v202
    %v218 = vcombine.low %v209, %v216
    %v220 = vunpack.c.l.s4 1966171168
    %v221 = vunpack.c.0.s8 %v220
    %v222 = vlaneseq
    %v223 = vshrl.u32 %v222, 7
    %v224 = vsub.s32 %v221, %v223
    %v225 = vrot.slane %v217, %v224
    %v227 = vunpack.c.l.s4 1966171168
    %v228 = vunpack.c.0.s8 %v227
    %v229 = vlaneseq
    %v230 = vshrl.u32 %v229, 7
    %v231 = vsub.s32 %v228, %v230
    %v232 = vrot.slane %v218, %v231
    %v233 = vcombine.low %v225, %v232
    %235 = vst [vmem:[#allocation4] sm:$0xff] %v233
    // Predicated region
    $region10: #{tpu_custom_call.1} parent=1 // pred_check
      _
    $region11: #{tpu_custom_call.1} parent=1 // pred_check_branch
      %237 = sbr.rel (0) target = $region13
    $region12: #{tpu_custom_call.1} parent=1 // pred_region
      %s239 = ssub.s32 128, 128
      %240 = vsyncadd [#allocation5], %s239
      %s242 = sshll.u32 [#allocation4], 4
      %s243 = int_to_ptr.vmem [resolvable:$true] %s242
      %245 = dma.vmem_to_hbm [thread:$0]  %s243, 128, %s2, [#allocation5]
    $region13: #{tpu_custom_call.1} parent=1 // pred_fallthru
      _
    // Predicated region
    $region14: #{tpu_custom_call.1} parent=1 // pred_check
      _
    $region15: #{tpu_custom_call.1} parent=1 // pred_check_branch
      %247 = sbr.rel (0) target = $region17
    $region16: #{tpu_custom_call.1} parent=1 // pred_region
      %248 = dma.done [#allocation5], 128
    $region17: #{tpu_custom_call.1} parent=1 // pred_fallthru
      _
    %249 = vsyncpa [#allocation5], 1

</llo_original>
